<compile_context>
chip_gen: v6e
topology: v6e:2x2x1
jax: 0.10.0
libtpu: 0.0.40
codegen_flags: <defaults>
</compile_context>

<pallas_src>
import functools

import jax
import jax.numpy as jnp
from jax.experimental import pallas as pl
from jax.experimental.pallas import tpu as pltpu


def _round_up(x, m):
    return (x + m - 1) // m * m


def _motif_scan_kernel(x_ref, w_ref, o_ref):
    """One grid step = (batch tile, L tile): a single MXU matmul + clamp.

    x_ref: (b_tile*K_pad, l_tile) bf16  im2col taps, rows grouped per batch row
    w_ref: (b_tile, b_tile*K_pad) bf16  block-diagonal per-row PSAM weights
    o_ref: (b_tile, l_tile)       f32   clamped scores, lane-dense over L
    """
    s = jnp.dot(w_ref[...], x_ref[...], preferred_element_type=jnp.float32)
    # output[output > 1] = 1  -- clamp fused in-kernel.
    o_ref[...] = jnp.minimum(s, 1.0).astype(o_ref.dtype)


@functools.partial(jax.jit, static_argnames=("l_tile", "b_tile", "interpret"))
def motif_scan_protein(x_onehot, w_protein, *, l_tile=2048, b_tile=8,
                       interpret=False):
    """x_onehot: [B, L, C] one-hot, w_protein: [M, C] PSAM weights of ONE protein.

    Returns clamped scores [B, L, 1] (f32), i.e. exactly the column the model
    consumes downstream.
    """
    B, L, C = x_onehot.shape
    M, Cw = w_protein.shape
    assert C == Cw, (C, Cw)
    K = M * C
    K_pad = _round_up(K, 8)

    # ---- tiling -----------------------------------------------------------
    b_tile = max(8, _round_up(b_tile, 8))          # sublane-exact batch tile
    B_pad = _round_up(B, b_tile)
    n_bt = B_pad // b_tile

    l_tile = max(128, _round_up(min(l_tile, _round_up(L, 128)), 128))
    # v7x has 2 TensorCores: if there is a single batch tile, split L so the
    # ("parallel","parallel") grid has >= 2 steps whenever L allows it.
    if n_bt == 1 and _round_up(L, 128) // l_tile < 2 and L > 128:
        l_tile = max(128, _round_up(pl.cdiv(L, 2), 128))
    L_k = _round_up(L, l_tile)
    n_lt = L_k // l_tile

    # Double-buffered VMEM footprint stays tiny (< 2 MiB with defaults), far
    # inside the 32 MiB scoped limit on every generation (incl. v7x).
    vmem_bytes = (2 * (b_tile * K_pad * l_tile * 2 + b_tile * l_tile * 4)
                  + b_tile * b_tile * K_pad * 2)
    assert vmem_bytes < 16 * 2 ** 20, vmem_bytes

    # ---- wrapper-side im2col (bf16; one-hot is exact in bf16) ---------------
    pad_l = (M - 1) // 2
    pad_total = L_k + M - 1                      # "same" halo + L->L_k padding
    x_pad = jnp.pad(x_onehot.astype(jnp.bfloat16),
                    ((0, B_pad - B), (pad_l, pad_total - L - pad_l), (0, 0)))
    # taps[b, k, c, l] = x_pad[b, l + k, c]  ->  rows ordered (batch, k, c)
    taps = jnp.stack([x_pad[:, k:k + L_k, :] for k in range(M)], axis=1)
    taps = jnp.transpose(taps, (0, 1, 3, 2)).reshape(B_pad, K, L_k)
    if K_pad != K:
        taps = jnp.pad(taps, ((0, 0), (0, K_pad - K), (0, 0)))
    xim = taps.reshape(B_pad * K_pad, L_k)       # (B_pad*K_pad, L_k) bf16

    # Block-diagonal weights: one (b_tile, b_tile*K_pad) matmul covers the
    # whole batch tile in a single MXU pass (no per-b loop, no accumulator).
    wvec = w_protein.reshape(K).astype(jnp.bfloat16)
    if K_pad != K:
        wvec = jnp.pad(wvec, (0, K_pad - K))
    w_bd = jnp.kron(jnp.eye(b_tile, dtype=jnp.bfloat16), wvec[None, :])

    out = pl.pallas_call(
        _motif_scan_kernel,
        out_shape=jax.ShapeDtypeStruct((B_pad, L_k), jnp.float32),
        grid_spec=pltpu.PrefetchScalarGridSpec(
            num_scalar_prefetch=0,
            grid=(n_bt, n_lt),
            in_specs=[
                # im2col taps of this (batch tile, L tile); exact (no halo).
                pl.BlockSpec((b_tile * K_pad, l_tile), lambda b, lt: (b, lt)),
                # Small resident block-diagonal weight matrix.
                pl.BlockSpec((b_tile, b_tile * K_pad), lambda b, lt: (0, 0)),
            ],
            out_specs=pl.BlockSpec((b_tile, l_tile), lambda b, lt: (b, lt)),
        ),
        compiler_params=pltpu.CompilerParams(
            dimension_semantics=("parallel", "parallel"),
        ),
        interpret=interpret,
    )(xim, w_bd)

    # Slice off padding and add the trailing singleton protein dim, fused
    # under the same jit (no intermediate full-width copy).
    return out[:B, :L, None]


class MotifModelJax:
    """JAX/Pallas port of MotifModel.forward."""

    def __init__(self, motifs, num_proteins=104, protein=1):
        self.motifs = motifs          # [num_proteins, M, 4] PSAM weights
        self.protein_idx = protein

    def forward(self, x_onehot, mc, l=None, prod=True):
        mc = jnp.expand_dims(mc, 1)                       # mc.unsqueeze(1)
        # Downstream only consumes one protein column; clamping is elementwise
        # so computing just that column is semantically identical to clamping
        # the full [B, L, P] score tensor and slicing.
        # Note: weights are bf16 in the MXU (f32 accumulate); switch wvec to
        # f32 if downstream ever needs the last ~3 decimal digits.
        w_protein = self.motifs[self.protein_idx]          # [M, 4]
        control_prediction = motif_scan_protein(x_onehot, w_protein)
        return control_prediction, mc


if __name__ == "__main__":
    key = jax.random.PRNGKey(0)
    k_seq, k_mot, k_mc = jax.random.split(key, 3)

    B, L = 2, 16            # batch, sequence length
    M = 6                   # motif width
    NUM_PROTEINS = 104
    PROTEIN_IDX = 1

    # Deterministic one-hot sequences [B, L, 4].
    bases = jax.random.randint(k_seq, (B, L), 0, 4)
    x_onehot = jax.nn.one_hot(bases, 4, dtype=jnp.float32)

    # Deterministic synthetic PSAM motifs [P, M, 4] (positive affinities).
    motifs = jax.random.uniform(
        k_mot, (NUM_PROTEINS, M, 4), dtype=jnp.float32, minval=0.0, maxval=0.5
    )

    # mc auxiliary input [B, L].
    mc = jax.random.normal(k_mc, (B, L), dtype=jnp.float32)

    model = MotifModelJax(motifs, num_proteins=NUM_PROTEINS, protein=PROTEIN_IDX)
    control_prediction, mc_out = model.forward(x_onehot, mc, l=None)

    control_prediction = jax.block_until_ready(control_prediction)
    mc_out = jax.block_until_ready(mc_out)

    # Shape / clamp semantics checks.
    assert control_prediction.shape == (B, L, 1)
    assert mc_out.shape == (B, 1, L)
    assert bool(jnp.all(control_prediction <= 1.0))

    # Numerical check vs. a pure-JAX reference (bf16-cast weights, f32 math).
    w_ref = motifs.astype(jnp.bfloat16).astype(jnp.float32)
    pad_l = (M - 1) // 2
    pad_r = M - 1 - pad_l
    xp = jnp.pad(x_onehot, ((0, 0), (pad_l, pad_r), (0, 0)))
    ref = jnp.zeros((B, L, NUM_PROTEINS), jnp.float32)
    for k in range(M):
        ref = ref + jnp.einsum("blc,pc->blp", xp[:, k:k + L, :], w_ref[:, k, :])
    ref = jnp.minimum(ref, 1.0)[:, :, PROTEIN_IDX:PROTEIN_IDX + 1]
    assert bool(jnp.allclose(control_prediction, ref, atol=1e-3, rtol=1e-3))

    print("KERNEL_OK")
</pallas_src>

<mosaic_0001>
module attributes {stable_mosaic.version = 11 : i64} {
  func.func @_motif_scan_kernel(%arg0: i32, %arg1: i32, %arg2: memref<192x128xbf16, #tpu.memory_space<vmem>>, %arg3: memref<8x192xbf16, #tpu.memory_space<vmem>>, %arg4: memref<8x128xf32, #tpu.memory_space<vmem>>) attributes {dimension_semantics = [#tpu.dimension_semantics<parallel>, #tpu.dimension_semantics<parallel>], iteration_bounds = array<i64: 1, 1>, scalar_prefetch = 0 : i64, scratch_operands = 0 : i64, tpu.core_type = #tpu.core_type<tc>, window_params = [{transform_indices = @transform_0, window_bounds = array<i64: 192, 128>}, {pipeline_mode = #tpu.pipeline_mode<synchronous>, transform_indices = @transform_1, window_bounds = array<i64: 8, 192>}, {transform_indices = @transform_2, window_bounds = array<i64: 8, 128>}]} {
    %c0 = arith.constant 0 : index
    %c0_0 = arith.constant 0 : index
    %0 = vector.load %arg3[%c0, %c0_0] : memref<8x192xbf16, #tpu.memory_space<vmem>>, vector<8x192xbf16>
    %c0_1 = arith.constant 0 : index
    %c0_2 = arith.constant 0 : index
    %1 = vector.load %arg2[%c0_1, %c0_2] : memref<192x128xbf16, #tpu.memory_space<vmem>>, vector<192x128xbf16>
    %cst = arith.constant dense<0.000000e+00> : vector<8x128xf32>
    %2 = tpu.matmul %0, %1, %cst {dimension_numbers = #tpu.dot_dimension_numbers<[1], [0], [0], [1], [0, 0, 1, 1], [], []>} : vector<8x192xbf16>, vector<192x128xbf16>, vector<8x128xf32> -> vector<8x128xf32>
    %cst_3 = arith.constant 1.000000e+00 : f32
    %3 = vector.broadcast %cst_3 : f32 to vector<8x128xf32>
    %4 = arith.minimumf %2, %3 : vector<8x128xf32>
    %c0_4 = arith.constant 0 : index
    %c0_5 = arith.constant 0 : index
    %5 = vector.load %arg4[%c0_4, %c0_5] : memref<8x128xf32, #tpu.memory_space<vmem>>, vector<8x128xf32>
    tpu.vector_store %arg4[%c0_4, %c0_5], %4 {strides = array<i32>} : memref<8x128xf32, #tpu.memory_space<vmem>>, vector<8x128xf32>,
    return
  }
  func.func @transform_0(%arg0: i32, %arg1: i32) -> (i32, i32) {
    %c0_i32 = arith.constant 0 : i32
    return %arg0, %arg1 : i32, i32
  }
  func.func @transform_1(%arg0: i32, %arg1: i32) -> (i32, i32) {
    %c0_i32 = arith.constant 0 : i32
    %c0_i32_0 = arith.constant 0 : i32
    %c0_i32_1 = arith.constant 0 : i32
    return %c0_i32, %c0_i32_0 : i32, i32
  }
  func.func @transform_2(%arg0: i32, %arg1: i32) -> (i32, i32) {
    %c0_i32 = arith.constant 0 : i32
    return %arg0, %arg1 : i32, i32
  }
}

</mosaic_0001>

<llo_original>
// kernel: motif_scan_protein.1
$region0: #{motif_scan_protein.1}
  #allocation0 [shape = 'u32[]', space=smem, size = 0x4, offset = 0x4, fixed_abs, tag = 'smem constant byte address 0x4 - core index']
  #allocation1 [shape = 'u32[144,128]{1,0:T(1,128)}', space=vmem, size = 0x12000, scoped, tag = 'internal scratch']
  %s0 = inlined_call_operand.vmem [shape: bf16[192,128], index: 0, kind: input, shape index: {}]
  %s1 = inlined_call_operand.vmem [shape: bf16[8,192], index: 1, kind: input, shape index: {}]
  %s2 = inlined_call_operand.vmem [shape: f32[8,128], index: 2, kind: output, shape index: {}]
  %s3 = sld [smem:[#allocation0]]
  $region18: #{motif_scan_protein.1} parent=0
    _
  %s5 = ssub.s32 1, %s3
  %s6 = scalar_select 0, %s5, %s3
  // Predicated region
  $region2: #{motif_scan_protein.1} parent=0 // pred_check
    _
  $region3: #{motif_scan_protein.1} parent=0 // pred_check_branch
    %8 = sbr.rel (0) target = $region5
  $region4: #{motif_scan_protein.1} parent=0 // pred_region
    _
  $region5: #{motif_scan_protein.1} parent=0 // pred_fallthru
    _
  // Predicated region
  $region6: #{motif_scan_protein.1} parent=0 // pred_check
    _
  $region7: #{motif_scan_protein.1} parent=0 // pred_check_branch
    %10 = sbr.rel (0) target = $region9
  $region8: #{motif_scan_protein.1} parent=0 // pred_region
    _
  $region9: #{motif_scan_protein.1} parent=0 // pred_fallthru
    _
  %v12 = vld [vmem:[%s1] sm:$0xff]
  %v13 = vld [vmem:[%s0] sm:$0xf]
  %v14 = vld [vmem:[%s0 + $0x4] sm:$0xf]
  %v15 = vld [vmem:[%s0 + $0x8] sm:$0xf]
  %v16 = vld [vmem:[%s0 + $0xc] sm:$0xf]
  %v17 = vld [vmem:[%s0 + $0x10] sm:$0xf]
  %v18 = vld [vmem:[%s0 + $0x14] sm:$0xf]
  %v19 = vld [vmem:[%s0 + $0x18] sm:$0xf]
  %v20 = vld [vmem:[%s0 + $0x1c] sm:$0xf]
  %v21 = vld [vmem:[%s0 + $0x20] sm:$0xf]
  %v22 = vld [vmem:[%s0 + $0x24] sm:$0xf]
  %v23 = vld [vmem:[%s0 + $0x28] sm:$0xf]
  %v24 = vld [vmem:[%s0 + $0x2c] sm:$0xf]
  %v25 = vld [vmem:[%s0 + $0x30] sm:$0xf]
  %v26 = vld [vmem:[%s0 + $0x34] sm:$0xf]
  %v27 = vld [vmem:[%s0 + $0x38] sm:$0xf]
  %v28 = vld [vmem:[%s0 + $0x3c] sm:$0xf]
  %v29 = vld [vmem:[%s0 + $0x40] sm:$0xf]
  %v30 = vld [vmem:[%s0 + $0x44] sm:$0xf]
  %v31 = vld [vmem:[%s0 + $0x48] sm:$0xf]
  %v32 = vld [vmem:[%s0 + $0x4c] sm:$0xf]
  %v33 = vld [vmem:[%s0 + $0x50] sm:$0xf]
  %v34 = vld [vmem:[%s0 + $0x54] sm:$0xf]
  %v35 = vld [vmem:[%s0 + $0x58] sm:$0xf]
  %v36 = vld [vmem:[%s0 + $0x5c] sm:$0xf]
  %v38 = vunpack.c.l.b16 %v12
  %v39 = vunpack.c.h.b16 %v12
  %v40 = vpack.c.b16 %v38, %v38
  %v41 = vpack.c.b16 %v39, %v39
  %v67 = vunpack.c.l.b16 %v13
  %v68 = vunpack.c.l.b16 %v14
  %v69 = vunpack.c.l.b16 %v15
  %v70 = vunpack.c.l.b16 %v16
  %v71 = vunpack.c.l.b16 %v17
  %v72 = vunpack.c.l.b16 %v18
  %v73 = vunpack.c.l.b16 %v19
  %v74 = vunpack.c.l.b16 %v20
  %v75 = vunpack.c.l.b16 %v21
  %v76 = vunpack.c.l.b16 %v22
  %v77 = vunpack.c.l.b16 %v23
  %v78 = vunpack.c.l.b16 %v24
  %v79 = vunpack.c.l.b16 %v25
  %v80 = vunpack.c.l.b16 %v26
  %v81 = vunpack.c.l.b16 %v27
  %v82 = vunpack.c.l.b16 %v28
  %v83 = vunpack.c.l.b16 %v29
  %v84 = vunpack.c.l.b16 %v30
  %v85 = vunpack.c.l.b16 %v31
  %v86 = vunpack.c.l.b16 %v32
  %v87 = vunpack.c.l.b16 %v33
  %v88 = vunpack.c.l.b16 %v34
  %v89 = vunpack.c.l.b16 %v35
  %v90 = vunpack.c.l.b16 %v36
  %v91 = vpack.c.b16 %v68, %v67
  %v92 = vpack.c.b16 %v70, %v69
  %v93 = vpack.c.b16 %v72, %v71
  %v94 = vpack.c.b16 %v74, %v73
  %v95 = vpack.c.b16 %v76, %v75
  %v96 = vpack.c.b16 %v78, %v77
  %v97 = vpack.c.b16 %v80, %v79
  %v98 = vpack.c.b16 %v82, %v81
  %v99 = vpack.c.b16 %v84, %v83
  %v100 = vpack.c.b16 %v86, %v85
  %v101 = vpack.c.b16 %v88, %v87
  %v102 = vpack.c.b16 %v90, %v89
  %vm115 = vcmask 523264
  %v117 = vsel %vm115, %v41, 0
  %119 = vmatprep.subr.bf16.mxu0 0
  %120 = vmatpush1.bf16.msra.mxu0 %v98
  %121 = vmatprep.subr.bf16.mxu0 0
  %122 = vmatpush1.bf16.msra.mxu0 %v97
  %123 = vmatprep.subr.bf16.mxu0 0
  %124 = vmatpush1.bf16.msra.mxu0 %v96
  %125 = vmatprep.subr.bf16.mxu0 0
  %126 = vmatpush1.bf16.msra.mxu0 %v95
  %127 = vmatprep.subr.bf16.mxu0 0
  %128 = vmatpush1.bf16.msra.mxu0 %v94
  %129 = vmatprep.subr.bf16.mxu0 0
  %130 = vmatpush1.bf16.msra.mxu0 %v93
  %131 = vmatprep.subr.bf16.mxu0 0
  %132 = vmatpush1.bf16.msra.mxu0 %v92
  %133 = vmatprep.subr.bf16.mxu0 0
  %134 = vmatpush1.bf16.msra.mxu0 %v91
  %135 = vmatprep.subr.bf16.mxu0 0
  %136 = vmatpush2.bf16.msra.mxu0 0
  %137 = vmatprep.subr.bf16.mxu0 0
  %138 = vmatpush2.bf16.msra.mxu0 0
  %139 = vmatprep.subr.bf16.mxu0 0
  %140 = vmatpush2.bf16.msra.mxu0 0
  %141 = vmatprep.subr.bf16.mxu0 0
  %142 = vmatpush2.bf16.msra.mxu0 0
  %143 = vmatprep.subr.bf16.mxu0 0
  %144 = vmatpush2.bf16.msra.mxu0 %v102
  %145 = vmatprep.subr.bf16.mxu0 0
  %146 = vmatpush2.bf16.msra.mxu0 %v101
  %147 = vmatprep.subr.bf16.mxu0 0
  %148 = vmatpush2.bf16.msra.mxu0 %v100
  %149 = vmatprep.subr.bf16.mxu0 0
  %150 = vmatpush2.bf16.msra.mxu0 %v99
  %151 = vmatprep.mubr.bf16.mxu0 %v117
  %152 = vmatmul.mubr.bf16.gmra.mxu0 %v40
  %v153 = vpop.f32.mrf.mxu0
  %v154 = vadd.f32 0.0, %v153
  %v155 = vpop.f32.mrf.mxu0
  %v156 = vpop.f32.mrf.mxu0
  %v157 = vpop.f32.mrf.mxu0
  %158 = vdwg.mxu0
  %v159 = vmin.f32 %v154, 1.0
  %160 = vst [vmem:[%s2] sm:$0xff] %v159
  // Predicated region
  $region10: #{motif_scan_protein.1} parent=0 // pred_check
    _
  $region11: #{motif_scan_protein.1} parent=0 // pred_check_branch
    %162 = sbr.rel (0) target = $region13
  $region12: #{motif_scan_protein.1} parent=0 // pred_region
    _
  $region13: #{motif_scan_protein.1} parent=0 // pred_fallthru
    _
  // Predicated region
  $region14: #{motif_scan_protein.1} parent=0 // pred_check
    _
  $region15: #{motif_scan_protein.1} parent=0 // pred_check_branch
    %164 = sbr.rel (0) target = $region17
  $region16: #{motif_scan_protein.1} parent=0 // pred_region
    _
  $region17: #{motif_scan_protein.1} parent=0 // pred_fallthru
    _

</llo_original>
